<compile_context>
chip_gen: v7x
topology: tpu7x:2x2x1
jax: 0.10.0
libtpu: 0.0.40
codegen_flags: <defaults>
</compile_context>

<pallas_src>
import jax
import jax.numpy as jnp
from jax import lax
from jax.experimental import pallas as pl
from jax.experimental.pallas import tpu as pltpu


# ---------------------------------------------------------------------------
# Layout / block-size helpers
# ---------------------------------------------------------------------------
def _spatial_factorization(n, w):
    """Split the flattened C*H*W axis into (S, L) with L the lane (last) dim.

    Prefer L = 128 so every store is unmasked and vregs are fully used."""
    if n % 128 == 0:
        return n // 128, 128
    # Fallback: keep W as the lane dim (full-dim block -> legal, just not
    # lane-dense; known masked-store perf cliff).
    return n // w, w


def _x_block_budget():
    """Per-step x-block (and out-block) byte target, sized per generation.

    Keeps total live VMEM (double-buffered x + out + prev/mask tiles, ~4x the
    block) comfortably under the chip's physical VMEM (64 MiB on v7x, 128 MiB
    on v5e/v6e) while staying >=4 MiB so the ~0.35us per-step overhead is <10%
    even at v7x's 3.2 TB/s HBM."""
    vmem_bytes = 128 << 20
    try:
        vmem_bytes = int(getattr(pltpu.get_tpu_info(), "vmem_capacity_bytes",
                                 vmem_bytes))
    except Exception:
        pass
    return int(min(8 << 20, max(4 << 20, vmem_bytes // 8)))


def _pick_blocks(batch_size, s_dim, l_dim, itemsize):
    """(bt, ts): samples per block and spatial rows per tile."""
    # Spatial tile: <= 128 sublanes so the (ts, L) mask tile is ~vreg-resident
    # and reused across the bt samples of the block. 128 is a multiple of 8 so
    # a partial trailing S block is still a legal block shape.
    ts = s_dim if s_dim <= 128 else 128
    tile_bytes = ts * l_dim * itemsize
    bt = max(1, min(batch_size, _x_block_budget() // max(1, tile_bytes)))
    return bt, ts


# ---------------------------------------------------------------------------
# Pallas kernels
# ---------------------------------------------------------------------------
def _cutmix_image_kernel(mask_ref, x_ref, prev_ref, o_ref):
    # mask_ref: (1, ts, L) int32; nonzero inside the cut box.
    # x_ref   : (bt, ts, L) spatial tile of the current batch block.
    # prev_ref: (1, ts, L)  same tile of the sample preceding this block
    #           (= rolled source of the block's first sample).
    # o_ref   : (bt, ts, L)
    bt = x_ref.shape[0]
    inside = mask_ref[...] != 0

    # Local sample 0: rolled source lives outside this block.
    o_ref[0:1, :, :] = jnp.where(inside, prev_ref[...], x_ref[0:1, :, :])

    # Local samples 1..bt-1: rolled source is the previous sample of the SAME
    # block, so the rolled batch never has to be re-read from HBM.
    if bt > 1:
        o_ref[1:bt, :, :] = jnp.where(
            inside, x_ref[0:bt - 1, :, :], x_ref[1:bt, :, :]
        )


def _cutmix_target_kernel(lam_ref, t_ref, tr_ref, o_ref):
    # lam_ref: SMEM float32 (1,) (scalar prefetch)
    # t_ref / tr_ref: VMEM int32 (bb, 1) — target and rolled target blocks
    # o_ref: VMEM float (bb, cb)
    cb = o_ref.shape[1]
    j = pl.program_id(1)
    lam = lam_ref[0]
    cls = j * cb + lax.broadcasted_iota(jnp.int32, o_ref.shape, 1)
    oh = (cls == t_ref[...]).astype(jnp.float32)
    ohr = (cls == tr_ref[...]).astype(jnp.float32)
    o_ref[...] = (lam * oh + (1.0 - lam) * ohr).astype(o_ref.dtype)


# ---------------------------------------------------------------------------
# pallas_call wrappers
# ---------------------------------------------------------------------------
def cutmix_image(batch, mask_sl):
    """batch: (B, C, H, W) float; mask_sl: (1, S, L) int32 box mask,
    S*L == C*H*W flattened row-major."""
    B = batch.shape[0]
    _, S, L = mask_sl.shape
    x = batch.reshape(B, S, L)                    # contiguous reshape (no copy)
    itemsize = x.dtype.itemsize
    bt, ts = _pick_blocks(B, S, L, itemsize)
    nb, ns = pl.cdiv(B, bt), pl.cdiv(S, ts)

    block_bytes = bt * ts * L * itemsize
    tile_bytes = ts * L * (4 + itemsize)          # int32 mask + prev sample tile
    vmem_need = 2 * (2 * block_bytes + tile_bytes)  # double-buffered streams
    vmem_limit = int(min(48 << 20, max(32 << 20, vmem_need * 3 // 2)))

    out = pl.pallas_call(
        _cutmix_image_kernel,
        out_shape=jax.ShapeDtypeStruct((B, S, L), x.dtype),
        grid_spec=pltpu.PrefetchScalarGridSpec(
            num_scalar_prefetch=0,
            grid=(nb, ns),
            in_specs=[
                # Box mask tile (batch-invariant).
                pl.BlockSpec((1, ts, L), lambda i, s: (0, s, 0)),
                # Current bt samples' spatial tile.
                pl.BlockSpec((bt, ts, L), lambda i, s: (i, s, 0)),
                # The single sample preceding the block: (i*bt - 1) mod B.
                pl.BlockSpec((1, ts, L), lambda i, s: ((i * bt + B - 1) % B, s, 0)),
            ],
            out_specs=pl.BlockSpec((bt, ts, L), lambda i, s: (i, s, 0)),
        ),
        compiler_params=pltpu.CompilerParams(
            # (batch-block, spatial-block) tiles are independent -> shard across
            # both TensorCores on v7x.
            dimension_semantics=("parallel", "parallel"),
            vmem_limit_bytes=vmem_limit,
        ),
    )(mask_sl, x, x)
    return out.reshape(batch.shape)


def cutmix_target(target, lam, num_classes, dtype):
    """target: (B,) int; lam: traced float32 scalar. Returns (B, num_classes)."""
    B = target.shape[0]
    t = target.astype(jnp.int32).reshape(B, 1)
    tr = jnp.roll(t, 1, axis=0)                   # tiny (B, 1) glue
    lam_arr = jnp.asarray(lam, dtype=jnp.float32).reshape((1,))

    bb = B if B <= 512 else 512                   # full dim or a multiple of 8
    cb = num_classes if num_classes <= 2048 else 2048  # full dim or mult. of 128

    out = pl.pallas_call(
        _cutmix_target_kernel,
        out_shape=jax.ShapeDtypeStruct((B, num_classes), dtype),
        grid_spec=pltpu.PrefetchScalarGridSpec(
            num_scalar_prefetch=1,                # lam -> SMEM
            grid=(pl.cdiv(B, bb), pl.cdiv(num_classes, cb)),
            in_specs=[
                pl.BlockSpec((bb, 1), lambda i, j, lam: (i, 0)),
                pl.BlockSpec((bb, 1), lambda i, j, lam: (i, 0)),
            ],
            out_specs=pl.BlockSpec((bb, cb), lambda i, j, lam: (i, j)),
        ),
        compiler_params=pltpu.CompilerParams(
            dimension_semantics=("parallel", "parallel"),
        ),
    )(lam_arr, t, tr)
    return out


# ---------------------------------------------------------------------------
# Device-side scalar randomness (no host round-trips)
# ---------------------------------------------------------------------------
def _box_params(key, shape, p, alpha):
    """Returns (applied bool, (y1, y2, x1, x2) int32, lam float32).

    Reproduces the torch reference exactly, including its W/H name swap
    (W = shape[-2], H = shape[-1]); identical to torchvision for square
    images and bit-matching its behaviour for non-square ones."""
    Wd, Hd = shape[-2], shape[-1]
    k_apply, k_lam, k_rx, k_ry = jax.random.split(key, 4)

    applied = jax.random.uniform(k_apply, ()) < p
    lam0 = jax.random.beta(k_lam, alpha, alpha)   # == Dirichlet([a, a])[0]

    r_x = jax.random.randint(k_rx, (), 0, Wd)
    r_y = jax.random.randint(k_ry, (), 0, Hd)
    r = 0.5 * jnp.sqrt(1.0 - lam0)
    r_w_half = (r * Wd).astype(jnp.int32)
    r_h_half = (r * Hd).astype(jnp.int32)
    x1 = jnp.maximum(r_x - r_w_half, 0)
    x2 = jnp.minimum(r_x + r_w_half, Wd)
    y1 = jnp.maximum(r_y - r_h_half, 0)
    y2 = jnp.minimum(r_y + r_h_half, Hd)

    area = ((x2 - x1) * (y2 - y1)).astype(jnp.float32)
    lam_box = 1.0 - area / float(Wd * Hd)
    lam = jnp.where(applied, lam_box, 1.0)
    return applied, (y1, y2, x1, x2), lam


def _box_mask_hw(shape, box):
    """(shape[-2], shape[-1]) bool mask: rows in [y1,y2), cols in [x1,x2)."""
    y1, y2, x1, x2 = box
    rows = jnp.arange(shape[-2], dtype=jnp.int32)[:, None]
    cols = jnp.arange(shape[-1], dtype=jnp.int32)[None, :]
    return (rows >= y1) & (rows < y2) & (cols >= x1) & (cols < x2)


# ---------------------------------------------------------------------------
# Module equivalent
# ---------------------------------------------------------------------------
class RandomCutmix:
    """JAX/Pallas port of the torchvision-style RandomCutmix transform.

    The whole forward pass (RNG, box, both Pallas kernels) is jitted end-to-end:
    no .item()/int() device->host syncs. The heavy image mix is skipped with
    lax.cond on the no-apply draw, so its 2*B*C*H*W HBM traffic only occurs when
    cutmix is actually applied."""

    def __init__(self, num_classes: int, p: float = 0.5, alpha: float = 1.0):
        assert num_classes > 0, "Please provide a valid positive value for the num_classes."
        assert alpha > 0, "Alpha param can't be zero."
        self.num_classes = num_classes
        self.p = p
        self.alpha = alpha
        self._fn = jax.jit(self._transform)

    def __call__(self, key, batch, target):
        if batch.ndim != 4:
            raise ValueError(f"Batch ndim should be 4. Got {batch.ndim}")
        if target.ndim != 1:
            raise ValueError(f"Target ndim should be 1. Got {target.ndim}")
        if not jnp.issubdtype(batch.dtype, jnp.floating):
            raise TypeError(f"Batch dtype should be a float tensor. Got {batch.dtype}.")
        if not jnp.issubdtype(target.dtype, jnp.integer):
            raise TypeError(f"Target dtype should be an integer tensor. Got {target.dtype}.")
        return self._fn(key, batch, target)

    def _transform(self, key, batch, target):
        B, C, H, W = batch.shape
        applied, box, lam = _box_params(key, batch.shape, self.p, self.alpha)

        def do_mix(b):
            # Tiny device-side glue: build the (H, W) box mask, tile over C and
            # reshape to the lane-dense (1, S, L) layout used by the image kernel.
            mask_hw = _box_mask_hw(batch.shape, box)
            S, L = _spatial_factorization(C * H * W, batch.shape[-1])
            mask_sl = (
                jnp.tile(mask_hw.reshape(-1), (C,)).astype(jnp.int32).reshape(1, S, L)
            )
            return cutmix_image(b, mask_sl)

        # Skip the full-image HBM pass entirely on the no-apply draw.
        mixed_batch = lax.cond(applied, do_mix, lambda b: b, batch)
        # lam == 1.0 when not applied -> the target kernel emits the plain one-hot.
        mixed_target = cutmix_target(target, lam, self.num_classes, batch.dtype)
        return mixed_batch, mixed_target


# ---------------------------------------------------------------------------
# Demo / smoke test
# ---------------------------------------------------------------------------
if __name__ == "__main__":
    B, C, H, W = 2, 4, 16, 16
    NUM_CLASSES = 10

    root = jax.random.PRNGKey(0)
    k_data, k_tgt, k_aug = jax.random.split(root, 3)

    batch = jax.random.normal(k_data, (B, C, H, W), dtype=jnp.float32)
    target = jax.random.randint(k_tgt, (B,), 0, NUM_CLASSES, dtype=jnp.int32)

    # p=1.0 so the cutmix path (and thus both Pallas kernels) always does real work.
    cutmix = RandomCutmix(num_classes=NUM_CLASSES, p=1.0, alpha=1.0)
    mixed_batch, mixed_target = cutmix(k_aug, batch, target)
    mixed_batch = jax.block_until_ready(mixed_batch)
    mixed_target = jax.block_until_ready(mixed_target)

    # ---- checks -----------------------------------------------------------
    assert mixed_batch.shape == (B, C, H, W) and mixed_batch.dtype == jnp.float32
    assert mixed_target.shape == (B, NUM_CLASSES) and mixed_target.dtype == jnp.float32
    # Mixed target rows are lam*one_hot + (1-lam)*one_hot_rolled -> sum to 1.
    assert bool(jnp.allclose(mixed_target.sum(axis=-1), 1.0, atol=1e-5))

    # Pure-JAX reference using the same device-side draws (same key).
    ref_applied, ref_box, ref_lam = _box_params(k_aug, batch.shape, 1.0, 1.0)
    ref_mask = _box_mask_hw(batch.shape, ref_box) & ref_applied
    rolled = jnp.roll(batch, 1, axis=0)
    ref_batch = jnp.where(ref_mask[None, None, :, :], rolled, batch)
    oh = jax.nn.one_hot(target, NUM_CLASSES, dtype=batch.dtype)
    ref_target = ref_lam * oh + (1.0 - ref_lam) * jnp.roll(oh, 1, axis=0)

    assert bool(jnp.allclose(mixed_batch, ref_batch))
    assert bool(jnp.allclose(mixed_target, ref_target, atol=1e-6))

    print("KERNEL_OK")
</pallas_src>

<mosaic_0001>
module attributes {stable_mosaic.version = 11 : i64} {
  func.func @_cutmix_image_kernel(%arg0: i32, %arg1: i32, %arg2: memref<1x8x128xi32, #tpu.memory_space<vmem>>, %arg3: memref<2x8x128xf32, #tpu.memory_space<vmem>>, %arg4: memref<1x8x128xf32, #tpu.memory_space<vmem>>, %arg5: memref<2x8x128xf32, #tpu.memory_space<vmem>>) attributes {dimension_semantics = [#tpu.dimension_semantics<parallel>, #tpu.dimension_semantics<parallel>], iteration_bounds = array<i64: 1, 1>, scalar_prefetch = 0 : i64, scratch_operands = 0 : i64, tpu.core_type = #tpu.core_type<tc>, window_params = [{transform_indices = @transform_0, window_bounds = array<i64: 1, 8, 128>}, {transform_indices = @transform_1, window_bounds = array<i64: 2, 8, 128>}, {transform_indices = @transform_2, window_bounds = array<i64: 1, 8, 128>}, {transform_indices = @transform_3, window_bounds = array<i64: 2, 8, 128>}]} {
    %c0 = arith.constant 0 : index
    %c0_0 = arith.constant 0 : index
    %c0_1 = arith.constant 0 : index
    %0 = vector.load %arg2[%c0, %c0_0, %c0_1] : memref<1x8x128xi32, #tpu.memory_space<vmem>>, vector<1x8x128xi32>
    %c0_i32 = arith.constant 0 : i32
    %1 = vector.broadcast %c0_i32 : i32 to vector<1x8x128xi32>
    %2 = arith.cmpi ne, %0, %1 : vector<1x8x128xi32>
    %c0_2 = arith.constant 0 : index
    %c0_3 = arith.constant 0 : index
    %c0_4 = arith.constant 0 : index
    %3 = vector.load %arg4[%c0_2, %c0_3, %c0_4] : memref<1x8x128xf32, #tpu.memory_space<vmem>>, vector<1x8x128xf32>
    %c0_5 = arith.constant 0 : index
    %c0_6 = arith.constant 0 : index
    %c0_7 = arith.constant 0 : index
    %4 = vector.load %arg3[%c0_5, %c0_6, %c0_7] : memref<2x8x128xf32, #tpu.memory_space<vmem>>, vector<1x8x128xf32>
    %5 = arith.select %2, %3, %4 : vector<1x8x128xi1>, vector<1x8x128xf32>
    %c0_8 = arith.constant 0 : index
    %c0_9 = arith.constant 0 : index
    %c0_10 = arith.constant 0 : index
    %6 = vector.load %arg5[%c0_8, %c0_9, %c0_10] : memref<2x8x128xf32, #tpu.memory_space<vmem>>, vector<1x8x128xf32>
    tpu.vector_store %arg5[%c0_8, %c0_9, %c0_10], %5 {strides = array<i32>} : memref<2x8x128xf32, #tpu.memory_space<vmem>>, vector<1x8x128xf32>,
    %c0_11 = arith.constant 0 : index
    %c0_12 = arith.constant 0 : index
    %c0_13 = arith.constant 0 : index
    %7 = vector.load %arg3[%c0_11, %c0_12, %c0_13] : memref<2x8x128xf32, #tpu.memory_space<vmem>>, vector<1x8x128xf32>
    %c1 = arith.constant 1 : index
    %c0_14 = arith.constant 0 : index
    %c0_15 = arith.constant 0 : index
    %8 = vector.load %arg3[%c1, %c0_14, %c0_15] : memref<2x8x128xf32, #tpu.memory_space<vmem>>, vector<1x8x128xf32>
    %9 = arith.select %2, %7, %8 : vector<1x8x128xi1>, vector<1x8x128xf32>
    %c1_16 = arith.constant 1 : index
    %c0_17 = arith.constant 0 : index
    %c0_18 = arith.constant 0 : index
    %10 = vector.load %arg5[%c1_16, %c0_17, %c0_18] : memref<2x8x128xf32, #tpu.memory_space<vmem>>, vector<1x8x128xf32>
    tpu.vector_store %arg5[%c1_16, %c0_17, %c0_18], %9 {strides = array<i32>} : memref<2x8x128xf32, #tpu.memory_space<vmem>>, vector<1x8x128xf32>,
    return
  }
  func.func @transform_0(%arg0: i32, %arg1: i32) -> (i32, i32, i32) {
    %c0_i32 = arith.constant 0 : i32
    %c0_i32_0 = arith.constant 0 : i32
    %c0_i32_1 = arith.constant 0 : i32
    return %c0_i32, %arg1, %c0_i32_0 : i32, i32, i32
  }
  func.func @transform_1(%arg0: i32, %arg1: i32) -> (i32, i32, i32) {
    %c0_i32 = arith.constant 0 : i32
    %c0_i32_0 = arith.constant 0 : i32
    return %arg0, %arg1, %c0_i32 : i32, i32, i32
  }
  func.func @transform_2(%arg0: i32, %arg1: i32) -> (i32, i32, i32) {
    %c2_i32 = arith.constant 2 : i32
    %0 = arith.muli %arg0, %c2_i32 : i32
    %c2_i32_0 = arith.constant 2 : i32
    %1 = arith.addi %0, %c2_i32_0 : i32
    %c1_i32 = arith.constant 1 : i32
    %2 = arith.subi %1, %c1_i32 : i32
    %c2_i32_1 = arith.constant 2 : i32
    %c0_i32 = arith.constant 0 : i32
    %3 = arith.cmpi eq, %c2_i32_1, %c0_i32 : i32
    %c1_i32_2 = arith.constant 1 : i32
    %4 = arith.select %3, %c1_i32_2, %c2_i32_1 : i32
    %5 = arith.remsi %2, %4 : i32
    %c0_i32_3 = arith.constant 0 : i32
    %6 = arith.cmpi ne, %5, %c0_i32_3 : i32
    %c0_i32_4 = arith.constant 0 : i32
    %7 = arith.cmpi slt, %5, %c0_i32_4 : i32
    %c0_i32_5 = arith.constant 0 : i32
    %8 = arith.cmpi slt, %4, %c0_i32_5 : i32
    %9 = arith.xori %7, %8 : i1
    %10 = arith.andi %9, %6 : i1
    %11 = arith.addi %5, %4 : i32
    %12 = arith.select %10, %11, %5 : i32
    %c0_i32_6 = arith.constant 0 : i32
    %c0_i32_7 = arith.constant 0 : i32
    return %12, %arg1, %c0_i32_6 : i32, i32, i32
  }
  func.func @transform_3(%arg0: i32, %arg1: i32) -> (i32, i32, i32) {
    %c0_i32 = arith.constant 0 : i32
    %c0_i32_0 = arith.constant 0 : i32
    return %arg0, %arg1, %c0_i32 : i32, i32, i32
  }
}

module attributes {stable_mosaic.version = 11 : i64} {
  func.func @_cutmix_target_kernel(%arg0: i32, %arg1: i32, %arg2: memref<1xf32, #tpu.memory_space<smem>>, %arg3: memref<2x1xi32, #tpu.memory_space<vmem>>, %arg4: memref<2x1xi32, #tpu.memory_space<vmem>>, %arg5: memref<2x10xf32, #tpu.memory_space<vmem>>) attributes {dimension_semantics = [#tpu.dimension_semantics<parallel>, #tpu.dimension_semantics<parallel>], iteration_bounds = array<i64: 1, 1>, scalar_prefetch = 1 : i64, scratch_operands = 0 : i64, tpu.core_type = #tpu.core_type<tc>, window_params = [{transform_indices = @transform_0, window_bounds = array<i64: 2, 1>}, {transform_indices = @transform_1, window_bounds = array<i64: 2, 1>}, {transform_indices = @transform_2, window_bounds = array<i64: 2, 10>}]} {
    %c0 = arith.constant 0 : index
    %0 = memref.load %arg2[%c0] : memref<1xf32, #tpu.memory_space<smem>>
    %c10_i32 = arith.constant 10 : i32
    %1 = arith.muli %arg1, %c10_i32 : i32
    %2 = tpu.iota {dimensions = array<i32: 1>} : vector<2x10xi32>
    %3 = vector.broadcast %1 : i32 to vector<2x10xi32>
    %4 = arith.addi %3, %2 : vector<2x10xi32>
    %c0_0 = arith.constant 0 : index
    %c0_1 = arith.constant 0 : index
    %5 = vector.load %arg3[%c0_0, %c0_1] : memref<2x1xi32, #tpu.memory_space<vmem>>, vector<2x1xi32>
    %6 = vector.broadcast %5 : vector<2x1xi32> to vector<2x10xi32>
    %7 = arith.cmpi eq, %4, %6 : vector<2x10xi32>
    %8 = arith.extui %7 : vector<2x10xi1> to vector<2x10xi32>
    %9 = arith.sitofp %8 : vector<2x10xi32> to vector<2x10xf32>
    %c0_2 = arith.constant 0 : index
    %c0_3 = arith.constant 0 : index
    %10 = vector.load %arg4[%c0_2, %c0_3] : memref<2x1xi32, #tpu.memory_space<vmem>>, vector<2x1xi32>
    %11 = vector.broadcast %10 : vector<2x1xi32> to vector<2x10xi32>
    %12 = arith.cmpi eq, %4, %11 : vector<2x10xi32>
    %13 = arith.extui %12 : vector<2x10xi1> to vector<2x10xi32>
    %14 = arith.sitofp %13 : vector<2x10xi32> to vector<2x10xf32>
    %15 = vector.broadcast %0 : f32 to vector<2x10xf32>
    %16 = arith.mulf %15, %9 : vector<2x10xf32>
    %cst = arith.constant 1.000000e+00 : f32
    %17 = arith.subf %cst, %0 : f32
    %18 = vector.broadcast %17 : f32 to vector<2x10xf32>
    %19 = arith.mulf %18, %14 : vector<2x10xf32>
    %20 = arith.addf %16, %19 : vector<2x10xf32>
    %c0_4 = arith.constant 0 : index
    %c0_5 = arith.constant 0 : index
    %21 = vector.load %arg5[%c0_4, %c0_5] : memref<2x10xf32, #tpu.memory_space<vmem>>, vector<2x10xf32>
    tpu.vector_store %arg5[%c0_4, %c0_5], %20 {strides = array<i32>} : memref<2x10xf32, #tpu.memory_space<vmem>>, vector<2x10xf32>,
    return
  }
  func.func @transform_0(%arg0: i32, %arg1: i32, %arg2: memref<1xf32, #tpu.memory_space<smem>>) -> (i32, i32) {
    %c0_i32 = arith.constant 0 : i32
    %c0_i32_0 = arith.constant 0 : i32
    return %arg0, %c0_i32 : i32, i32
  }
  func.func @transform_1(%arg0: i32, %arg1: i32, %arg2: memref<1xf32, #tpu.memory_space<smem>>) -> (i32, i32) {
    %c0_i32 = arith.constant 0 : i32
    %c0_i32_0 = arith.constant 0 : i32
    return %arg0, %c0_i32 : i32, i32
  }
  func.func @transform_2(%arg0: i32, %arg1: i32, %arg2: memref<1xf32, #tpu.memory_space<smem>>) -> (i32, i32) {
    %c0_i32 = arith.constant 0 : i32
    return %arg0, %arg1 : i32, i32
  }
}

</mosaic_0001>

<llo_original>
// kernel: branch_1_fun.1
$region0: #{branch_1_fun.1}
  #allocation0 [shape = 'u32[]', space=smem, size = 0x4, offset = 0x4, fixed_abs, tag = 'smem constant byte address 0x4 - core index']
  #allocation1 [shape = 'u32[144,128]{1,0:T(1,128)}', space=vmem, size = 0x12000, scoped, tag = 'internal scratch']
  %s0 = inlined_call_operand.vmem [shape: s32[1,8,128], index: 0, kind: input, shape index: {}]
  %s1 = inlined_call_operand.vmem [shape: f32[2,8,128], index: 1, kind: input, shape index: {}, may-alias: {1,2}]
  %s2 = inlined_call_operand.vmem [shape: f32[2,8,128], index: 2, kind: input, shape index: {}, may-alias: {1,2}]
  %s3 = inlined_call_operand.vmem [shape: f32[2,8,128], index: 3, kind: output, shape index: {}]
  %s4 = sld [smem:[#allocation0]]
  $region22: #{branch_1_fun.1} parent=0
    _
  %s6 = ssub.s32 1, %s4
  %s7 = scalar_select 0, %s6, %s4
  // Predicated region
  $region2: #{branch_1_fun.1} parent=0 // pred_check
    _
  $region3: #{branch_1_fun.1} parent=0 // pred_check_branch
    %9 = sbr.rel (0) target = $region5
  $region4: #{branch_1_fun.1} parent=0 // pred_region
    _
  $region5: #{branch_1_fun.1} parent=0 // pred_fallthru
    _
  // Predicated region
  $region6: #{branch_1_fun.1} parent=0 // pred_check
    _
  $region7: #{branch_1_fun.1} parent=0 // pred_check_branch
    %11 = sbr.rel (0) target = $region9
  $region8: #{branch_1_fun.1} parent=0 // pred_region
    _
  $region9: #{branch_1_fun.1} parent=0 // pred_fallthru
    _
  // Predicated region
  $region10: #{branch_1_fun.1} parent=0 // pred_check
    _
  $region11: #{branch_1_fun.1} parent=0 // pred_check_branch
    %13 = sbr.rel (0) target = $region13
  $region12: #{branch_1_fun.1} parent=0 // pred_region
    %s14 = smul.u32 0, 2
    %s15 = sadd.s32 %s14, 1
    %p16 = scmp.lt.s32.totalorder %s15, 0
    %s17 = ssub.s32 0, %s15
    %s18 = scalar_select %p16, %s17, %s15
    %s19 = sand.u32 %s18, 1
    %s20 = ssub.s32 0, %s19
    %s21 = scalar_select %p16, %s20, %s19
    %p22 = scmp.ne.s32.totalorder %s21, 0
    %p23 = scmp.lt.s32.totalorder %s21, 0
    %p24 = pnand %p23, %p22
    %p25 = pneg %p24
    %s26 = sadd.s32 %s21, 2
    %s27 = scalar_select %p25, %s26, %s21
    %p28 = scmp.lt.s32.totalorder %s27, 1
    %s29 = scalar_select %p28, %s27, 1
    %s30 = smul.addr %s29, 8
    %s31 = scalar_lea.vmem %s2, %s30
    %s32 = smul.u32 0, 2
    %s33 = sadd.s32 %s32, 1
    %p34 = scmp.lt.s32.totalorder %s33, 0
    %s35 = ssub.s32 0, %s33
    %s36 = scalar_select %p34, %s35, %s33
    %s37 = sand.u32 %s36, 1
    %s38 = ssub.s32 0, %s37
    %s39 = scalar_select %p34, %s38, %s37
    %p40 = scmp.ne.s32.totalorder %s39, 0
    %p41 = scmp.lt.s32.totalorder %s39, 0
    %p42 = pnand %p41, %p40
    %p43 = pneg %p42
    %s44 = sadd.s32 %s39, 2
    %s45 = scalar_select %p43, %s44, %s39
  $region13: #{branch_1_fun.1} parent=0 // pred_fallthru
    _
  %s46 = smul.u32 0, 2
  %s47 = sadd.s32 %s46, 1
  %p48 = scmp.lt.s32.totalorder %s47, 0
  %s49 = ssub.s32 0, %s47
  %s50 = scalar_select %p48, %s49, %s47
  %s51 = sand.u32 %s50, 1
  %s52 = ssub.s32 0, %s51
  %s53 = scalar_select %p48, %s52, %s51
  %p54 = scmp.ne.s32.totalorder %s53, 0
  %p55 = scmp.lt.s32.totalorder %s53, 0
  %p56 = pnand %p55, %p54
  %p57 = pneg %p56
  %s58 = sadd.s32 %s53, 2
  %s59 = scalar_select %p57, %s58, %s53
  %p60 = scmp.lt.s32.totalorder %s59, 1
  %s61 = scalar_select %p60, %s59, 1
  %s62 = smul.addr %s61, 8
  %s63 = scalar_lea.vmem %s2, %s62
  %s64 = smul.u32 0, 2
  %s65 = sadd.s32 %s64, 1
  %p66 = scmp.lt.s32.totalorder %s65, 0
  %s67 = ssub.s32 0, %s65
  %s68 = scalar_select %p66, %s67, %s65
  %s69 = sand.u32 %s68, 1
  %s70 = ssub.s32 0, %s69
  %s71 = scalar_select %p66, %s70, %s69
  %p72 = scmp.ne.s32.totalorder %s71, 0
  %p73 = scmp.lt.s32.totalorder %s71, 0
  %p74 = pnand %p73, %p72
  %p75 = pneg %p74
  %s76 = sadd.s32 %s71, 2
  %s77 = scalar_select %p75, %s76, %s71
  %p78 = scmp.lt.s32.totalorder %s77, 1
  %s79 = scalar_select %p78, %s77, 1
  %s80 = smul.addr %s79, 8
  %s81 = scalar_lea.vmem %s2, %s80
  %s82 = smul.u32 0, 2
  %s83 = sadd.s32 %s82, 1
  %p84 = scmp.lt.s32.totalorder %s83, 0
  %s85 = ssub.s32 0, %s83
  %s86 = scalar_select %p84, %s85, %s83
  %s87 = sand.u32 %s86, 1
  %s88 = ssub.s32 0, %s87
  %s89 = scalar_select %p84, %s88, %s87
  %p90 = scmp.ne.s32.totalorder %s89, 0
  %p91 = scmp.lt.s32.totalorder %s89, 0
  %p92 = pnand %p91, %p90
  %p93 = pneg %p92
  %s94 = sadd.s32 %s89, 2
  %s95 = scalar_select %p93, %s94, %s89
  %v96 = vld [vmem:[%s0] sm:$0xff]
  %vm97 = vcmp.ne.s32.totalorder %v96, 0
  %v98 = vld [vmem:[%s81] sm:$0xff]
  %v99 = vld [vmem:[%s1] sm:$0xff]
  %v100 = vsel %vm97, %v98, %v99
  %101 = vst [vmem:[%s3] sm:$0xff] %v100
  %v102 = vld [vmem:[%s1] sm:$0xff]
  %s103 = scalar_lea.vmem %s1, 8
  %v104 = vld [vmem:[%s103] sm:$0xff]
  %v105 = vsel %vm97, %v102, %v104
  %s106 = scalar_lea.vmem %s3, 8
  %107 = vst [vmem:[%s106] sm:$0xff] %v105
  // Predicated region
  $region14: #{branch_1_fun.1} parent=0 // pred_check
    _
  $region15: #{branch_1_fun.1} parent=0 // pred_check_branch
    %109 = sbr.rel (0) target = $region17
  $region16: #{branch_1_fun.1} parent=0 // pred_region
    _
  $region17: #{branch_1_fun.1} parent=0 // pred_fallthru
    _
  // Predicated region
  $region18: #{branch_1_fun.1} parent=0 // pred_check
    _
  $region19: #{branch_1_fun.1} parent=0 // pred_check_branch
    %111 = sbr.rel (0) target = $region21
  $region20: #{branch_1_fun.1} parent=0 // pred_region
    _
  $region21: #{branch_1_fun.1} parent=0 // pred_fallthru
    _

// kernel: _transform.1
$region0: #{_transform.1}
  #allocation0 [shape = 'u32[]', space=smem, size = 0x4, offset = 0x4, fixed_abs, tag = 'smem constant byte address 0x4 - core index']
  #allocation1 [shape = 'u32[144,128]{1,0:T(1,128)}', space=vmem, size = 0x12000, scoped, tag = 'internal scratch']
  #allocation2 [shape = 's32[1]{0}', space=sflag, size = 0x4, scoped, tag = 'scoped memory for _transform.1']
  #allocation3 [shape = 'f32[1]{0:T(128)S(6)}', space=smem, size = 0x200, scoped, tag = 'prefetched SMEM operand 0']
  %s0 = inlined_call_operand.<no memory space> [shape: f32[1], index: 0, kind: input, shape index: {}]
  %s1 = inlined_call_operand.vmem [shape: s32[2,1], index: 1, kind: input, shape index: {}]
  %s2 = inlined_call_operand.vmem [shape: s32[2,1], index: 2, kind: input, shape index: {}]
  %s3 = inlined_call_operand.hbm [shape: f32[2,10], index: 3, kind: output, shape index: {}]
  %s4 = sld [smem:[#allocation0]]
  $region18: #{_transform.1} parent=0
    _
  %s6 = ssub.s32 1, %s4
  %s7 = scalar_select 0, %s6, %s4
  %8 = sst [smem:[#allocation3]] %s0
  $region1: #{_transform.1} parent=0
    #allocation4 [shape = 'u8[1024]{0}', space=vmem, size = 0x400, scoped, tag = 'output window, operand 0, single buffered']
    #allocation5 [shape = 's32[1]{0}', space=sflag, size = 0x4, scoped, tag = 'scoped memory for _transform.1']
    %9 = vsyncpa [#allocation5], 0
    // Predicated region
    $region2: #{_transform.1} parent=1 // pred_check
      _
    $region3: #{_transform.1} parent=1 // pred_check_branch
      %11 = sbr.rel (0) target = $region5
    $region4: #{_transform.1} parent=1 // pred_region
      _
    $region5: #{_transform.1} parent=1 // pred_fallthru
      _
    // Predicated region
    $region6: #{_transform.1} parent=1 // pred_check
      _
    $region7: #{_transform.1} parent=1 // pred_check_branch
      %13 = sbr.rel (0) target = $region9
    $region8: #{_transform.1} parent=1 // pred_region
      _
    $region9: #{_transform.1} parent=1 // pred_fallthru
      _
    %s14 = sld [smem:[#allocation3]]
    %s15 = smul.u32 0, 10
    %v16 = vlaneseq
    %v17 = vand.u32 %v16, 127
    %v18 = vstv %s15
    %v19 = vadd.s32 %v18, %v17
    %v20 = vld [vmem:[%s1] sm:$0x3]
    %21 = vset.pattern.permute.xlu0 0
    %22 = vperm.xlu0 %21, %v20
    %v23 = vpop.permute.xlu0 %22
    %vm24 = vcmp.eq.s32.totalorder %v19, %v23
    %v25 = vsel %vm24, 1, 0
    %v26 = vcvt.s32.f32 %v25
    %v27 = vld [vmem:[%s2] sm:$0x3]
    %28 = vset.pattern.permute.xlu0 0
    %29 = vperm.xlu0 %28, %v27
    %v30 = vpop.permute.xlu0 %29
    %vm31 = vcmp.eq.s32.totalorder %v19, %v30
    %v32 = vsel %vm31, 1, 0
    %v33 = vcvt.s32.f32 %v32
    %v34 = vstv %s14
    %v35 = vmul.f32 %v34, %v26
    %s36 = ssub.f32 1.0, %s14
    %v37 = vstv %s36
    %v38 = vmul.f32 %v37, %v33
    %v39 = vadd.f32 %v35, %v38
    %vm40 = vcmask 74752
    %41 = vst.msk [vmem:[#allocation4] sm:$0x3] %vm40, %v39
    // Predicated region
    $region10: #{_transform.1} parent=1 // pred_check
      _
    $region11: #{_transform.1} parent=1 // pred_check_branch
      %43 = sbr.rel (0) target = $region13
    $region12: #{_transform.1} parent=1 // pred_region
      %s45 = ssub.s32 32, 32
      %46 = vsyncadd [#allocation5], %s45
      %s48 = sshll.u32 [#allocation4], 4
      %s49 = int_to_ptr.vmem [resolvable:$true] %s48
      %51 = dma.vmem_to_hbm [thread:$0]  %s49, 32, %s3, [#allocation5]
    $region13: #{_transform.1} parent=1 // pred_fallthru
      _
    // Predicated region
    $region14: #{_transform.1} parent=1 // pred_check
      _
    $region15: #{_transform.1} parent=1 // pred_check_branch
      %53 = sbr.rel (0) target = $region17
    $region16: #{_transform.1} parent=1 // pred_region
      %54 = dma.done [#allocation5], 32
    $region17: #{_transform.1} parent=1 // pred_fallthru
      _
    %55 = vsyncpa [#allocation5], 1

</llo_original>
